<compile_context>
chip_gen: v7x
topology: tpu7x:2x2x1
jax: 0.10.0
libtpu: 0.0.40
codegen_flags: <defaults>
</compile_context>

<pallas_src>
import jax
import jax.numpy as jnp
from jax.experimental import pallas as pl
from jax.experimental.pallas import tpu as pltpu


LANE = 128
SUBLANE = 8
_MAX_WIDTH = 1024                       # lane-dense slab width (multiple of 128)
_TARGET_BLOCK_BYTES = 2 * 1024 * 1024   # ~2 MiB/block; in+out double-buffered ~8 MiB
                                        # (fits v5e's 16 MiB default scoped VMEM)


def _parametric_sigmoid_kernel(params_ref, x_ref, o_ref):
    # params_ref lives in SMEM (scalar prefetch): params_ref[0] = a, params_ref[1] = b
    a = params_ref[0]
    b = params_ref[1]
    # Upcast to f32 for the transcendental (required for bf16 on v5e); cast back on store.
    x = x_ref[...].astype(jnp.float32)
    y = jax.nn.sigmoid(a * x + b)       # EUP logistic; numerically robust
    o_ref[...] = y.astype(o_ref.dtype)


def _round_up(v, m):
    return (v + m - 1) // m * m


def parametric_sigmoid(x, a, b):
    """Applies sigmoid(a * x + b) elementwise via a Pallas TPU kernel.

    x : jnp array of any shape (f32 / bf16 / ...)
    a, b : python / jnp scalars (the module's learnable parameters)
    """
    orig_shape = x.shape
    dtype = x.dtype
    flat = x.reshape(-1)
    n = flat.shape[0]

    # Pick the widest lane-dense width (multiple of 128) that divides n, so no
    # padded copy is materialized in the common case.
    width = None
    w = _MAX_WIDTH
    while w >= LANE:
        if n % w == 0:
            width = w
            break
        w //= 2

    n_pad = 0
    if width is None:
        # Awkward element count: pad minimally to a multiple of 128 (rare path).
        width = LANE
        n_pad = _round_up(max(n, LANE), LANE) - n
        flat = jnp.concatenate([flat, jnp.zeros((n_pad,), dtype)])

    rows = flat.shape[0] // width
    slab = flat.reshape(rows, width)

    # Row tile: ~2 MiB per block in the I/O dtype, multiple of 8 sublanes,
    # never larger than needed for this array.
    itemsize = jnp.dtype(dtype).itemsize
    tm = max(SUBLANE,
             (_TARGET_BLOCK_BYTES // (width * itemsize)) // SUBLANE * SUBLANE)
    tm = min(tm, _round_up(rows, SUBLANE))
    # Ceil-div grid: the tail (or oversized) block is handled by Pallas'
    # automatic out-of-bounds padding/masking for partial blocks.
    grid = (pl.cdiv(rows, tm),)

    params = jnp.array([a, b], dtype=jnp.float32)

    out_slab = pl.pallas_call(
        _parametric_sigmoid_kernel,
        out_shape=jax.ShapeDtypeStruct((rows, width), dtype),
        grid_spec=pltpu.PrefetchScalarGridSpec(
            num_scalar_prefetch=1,
            grid=grid,
            in_specs=[pl.BlockSpec((tm, width), lambda i, params: (i, 0))],
            out_specs=pl.BlockSpec((tm, width), lambda i, params: (i, 0)),
        ),
        compiler_params=pltpu.CompilerParams(
            dimension_semantics=("parallel",),
        ),
    )(params, slab)

    out = out_slab.reshape(-1)
    if n_pad:
        out = out[:n]
    return out.reshape(orig_shape)


if __name__ == "__main__":
    # Parameter init matching the module's __init__:
    #   self.a = nn.Parameter(torch.tensor(1.0)); self.b = nn.Parameter(torch.tensor(0.0))
    a_param = 1.0
    b_param = 0.0

    key = jax.random.PRNGKey(0)
    x = jax.random.normal(key, (2, 4, 16, 16), dtype=jnp.float32)  # NCHW-like input

    y = parametric_sigmoid(x, a_param, b_param)
    y = jax.block_until_ready(y)
    y_ref = jax.nn.sigmoid(a_param * x + b_param)
    assert y.shape == x.shape and y.dtype == x.dtype
    assert jnp.max(jnp.abs(y - y_ref)) < 1e-5

    # bf16 I/O path (in-kernel upcast, half the HBM bytes moved).
    x_bf16 = x.astype(jnp.bfloat16)
    y_bf16 = jax.block_until_ready(parametric_sigmoid(x_bf16, a_param, b_param))
    y_bf16_ref = jax.nn.sigmoid(a_param * x_bf16.astype(jnp.float32) + b_param)
    assert y_bf16.dtype == jnp.bfloat16
    assert jnp.max(jnp.abs(y_bf16.astype(jnp.float32) - y_bf16_ref)) < 2e-2

    # Awkward (non-multiple-of-128) size exercises the rare padding fallback.
    x_odd = jax.random.normal(jax.random.PRNGKey(1), (3, 5, 7), dtype=jnp.float32)
    y_odd = jax.block_until_ready(parametric_sigmoid(x_odd, 2.0, -0.5))
    assert jnp.max(jnp.abs(y_odd - jax.nn.sigmoid(2.0 * x_odd - 0.5))) < 1e-5

    print("KERNEL_OK")
</pallas_src>

<mosaic_0001>
module attributes {stable_mosaic.version = 11 : i64} {
  func.func @_parametric_sigmoid_kernel(%arg0: i32, %arg1: memref<2xf32, #tpu.memory_space<smem>>, %arg2: memref<8x1024xf32, #tpu.memory_space<vmem>>, %arg3: memref<8x1024xf32, #tpu.memory_space<vmem>>) attributes {dimension_semantics = [#tpu.dimension_semantics<parallel>], iteration_bounds = array<i64: 1>, scalar_prefetch = 1 : i64, scratch_operands = 0 : i64, tpu.core_type = #tpu.core_type<tc>, window_params = [{transform_indices = @transform_0, window_bounds = array<i64: 8, 1024>}, {transform_indices = @transform_1, window_bounds = array<i64: 8, 1024>}]} {
    %c0 = arith.constant 0 : index
    %0 = memref.load %arg1[%c0] : memref<2xf32, #tpu.memory_space<smem>>
    %c1 = arith.constant 1 : index
    %1 = memref.load %arg1[%c1] : memref<2xf32, #tpu.memory_space<smem>>
    %c0_0 = arith.constant 0 : index
    %c0_1 = arith.constant 0 : index
    %2 = vector.load %arg2[%c0_0, %c0_1] : memref<8x1024xf32, #tpu.memory_space<vmem>>, vector<8x1024xf32>
    %3 = vector.broadcast %0 : f32 to vector<8x1024xf32>
    %4 = arith.mulf %3, %2 : vector<8x1024xf32>
    %5 = vector.broadcast %1 : f32 to vector<8x1024xf32>
    %6 = arith.addf %4, %5 : vector<8x1024xf32>
    %7 = arith.negf %6 : vector<8x1024xf32>
    %8 = math.exp %7 : vector<8x1024xf32>
    %cst = arith.constant 1.000000e+00 : f32
    %9 = vector.broadcast %cst : f32 to vector<8x1024xf32>
    %10 = arith.addf %9, %8 : vector<8x1024xf32>
    %11 = arith.divf %9, %10 : vector<8x1024xf32>
    %c0_2 = arith.constant 0 : index
    %c0_3 = arith.constant 0 : index
    %12 = vector.load %arg3[%c0_2, %c0_3] : memref<8x1024xf32, #tpu.memory_space<vmem>>, vector<8x1024xf32>
    tpu.vector_store %arg3[%c0_2, %c0_3], %11 {strides = array<i32>} : memref<8x1024xf32, #tpu.memory_space<vmem>>, vector<8x1024xf32>,
    return
  }
  func.func @transform_0(%arg0: i32, %arg1: memref<2xf32, #tpu.memory_space<smem>>) -> (i32, i32) {
    %c0_i32 = arith.constant 0 : i32
    %c0_i32_0 = arith.constant 0 : i32
    return %arg0, %c0_i32 : i32, i32
  }
  func.func @transform_1(%arg0: i32, %arg1: memref<2xf32, #tpu.memory_space<smem>>) -> (i32, i32) {
    %c0_i32 = arith.constant 0 : i32
    %c0_i32_0 = arith.constant 0 : i32
    return %arg0, %c0_i32 : i32, i32
  }
}

</mosaic_0001>

<llo_original>
// kernel: tpu_custom_call.1
$region0: #{tpu_custom_call.1}
  #allocation0 [shape = 'u32[]', space=smem, size = 0x4, offset = 0x4, fixed_abs, tag = 'smem constant byte address 0x4 - core index']
  #allocation1 [shape = 'u32[144,128]{1,0:T(1,128)}', space=vmem, size = 0x12000, scoped, tag = 'internal scratch']
  #allocation2 [shape = 's32[1]{0}', space=sflag, size = 0x4, scoped, tag = 'scoped memory for tpu_custom_call.1']
  #allocation3 [shape = 'u8[512]{0}', space=smem, size = 0x200, scoped, tag = 'prefetched SMEM operand 0']
  %s0 = inlined_call_operand.hbm [shape: f32[2], index: 0, kind: input, shape index: {}]
  %s1 = inlined_call_operand.hbm [shape: f32[2,1024], index: 1, kind: input, shape index: {}]
  %s2 = inlined_call_operand.hbm [shape: f32[2,1024], index: 2, kind: output, shape index: {}]
  %s3 = sld [smem:[#allocation0]]
  $region18: #{tpu_custom_call.1} parent=0
    _
  %s5 = ssub.s32 1, %s3
  %s6 = scalar_select 0, %s5, %s3
  %8 = dma.hbm_to_smem %s0, 16, [#allocation3], [#allocation2]
  %9 = dma.done [#allocation2], 16
  %10 = sfence
  $region1: #{tpu_custom_call.1} parent=0
    #allocation4 [shape = 'u8[32768]{0}', space=vmem, size = 0x8000, scoped, tag = 'input window, operand 1, single buffered']
    #allocation5 [shape = 's32[1]{0}', space=sflag, size = 0x4, scoped, tag = 'scoped memory for tpu_custom_call.1']
    #allocation6 [shape = 's32[1]{0}', space=sflag, size = 0x4, scoped, tag = 'scoped memory for tpu_custom_call.1']
    #allocation7 [shape = 'u8[32768]{0}', space=vmem, size = 0x8000, scoped, tag = 'output window, operand 0, single buffered']
    %11 = vsyncpa [#allocation5], 0
    %12 = vsyncpa [#allocation6], 0
    // Predicated region
    $region2: #{tpu_custom_call.1} parent=1 // pred_check
      _
    $region3: #{tpu_custom_call.1} parent=1 // pred_check_branch
      %14 = sbr.rel (0) target = $region5
    $region4: #{tpu_custom_call.1} parent=1 // pred_region
      %s16 = ssub.s32 1024, 256
      %17 = vsyncadd [#allocation5], %s16
      %s18 = sshll.u32 [#allocation4], 4
      %s19 = int_to_ptr.vmem [resolvable:$true] %s18
      %24 = dma.hbm_to_vmem [thread:$0]  %s1, 256, %s19, [#allocation5], 256, 256, 16
    $region5: #{tpu_custom_call.1} parent=1 // pred_fallthru
      _
    // Predicated region
    $region6: #{tpu_custom_call.1} parent=1 // pred_check
      _
    $region7: #{tpu_custom_call.1} parent=1 // pred_check_branch
      %26 = sbr.rel (0) target = $region9
    $region8: #{tpu_custom_call.1} parent=1 // pred_region
      %27 = dma.done [#allocation5], 1024
    $region9: #{tpu_custom_call.1} parent=1 // pred_fallthru
      _
    %s28 = sld [smem:[#allocation3]]
    %s29 = sld [smem:[#allocation3 + $0x1]]
    %v30 = vld [vmem:[#allocation4] sm:$0xff]
    %v31 = vld [vmem:[#allocation4 + $0x8] sm:$0xff]
    %v32 = vld [vmem:[#allocation4 + $0x10] sm:$0xff]
    %v33 = vld [vmem:[#allocation4 + $0x18] sm:$0xff]
    %v34 = vld [vmem:[#allocation4 + $0x20] sm:$0xff]
    %v35 = vld [vmem:[#allocation4 + $0x28] sm:$0xff]
    %v36 = vld [vmem:[#allocation4 + $0x30] sm:$0xff]
    %v37 = vld [vmem:[#allocation4 + $0x38] sm:$0xff]
    %v38 = vstv %s28
    %v39 = vmul.f32 %v38, %v30
    %v40 = vmul.f32 %v38, %v31
    %v41 = vmul.f32 %v38, %v32
    %v42 = vmul.f32 %v38, %v33
    %v43 = vmul.f32 %v38, %v34
    %v44 = vmul.f32 %v38, %v35
    %v45 = vmul.f32 %v38, %v36
    %v46 = vmul.f32 %v38, %v37
    %v47 = vstv %s29
    %v48 = vadd.f32 %v39, %v47
    %v49 = vadd.f32 %v40, %v47
    %v50 = vadd.f32 %v41, %v47
    %v51 = vadd.f32 %v42, %v47
    %v52 = vadd.f32 %v43, %v47
    %v53 = vadd.f32 %v44, %v47
    %v54 = vadd.f32 %v45, %v47
    %v55 = vadd.f32 %v46, %v47
    %v56 = vxor.u32 %v48, 2147483648
    %v57 = vxor.u32 %v49, 2147483648
    %v58 = vxor.u32 %v50, 2147483648
    %v59 = vxor.u32 %v51, 2147483648
    %v60 = vxor.u32 %v52, 2147483648
    %v61 = vxor.u32 %v53, 2147483648
    %v62 = vxor.u32 %v54, 2147483648
    %v63 = vxor.u32 %v55, 2147483648
    %v64 = vmul.f32 %v56, 1.442695
    %v65 = vpow.pop %v64
    %v66 = vmul.f32 %v57, 1.442695
    %v67 = vpow.pop %v66
    %v68 = vmul.f32 %v58, 1.442695
    %v69 = vpow.pop %v68
    %v70 = vmul.f32 %v59, 1.442695
    %v71 = vpow.pop %v70
    %v72 = vmul.f32 %v60, 1.442695
    %v73 = vpow.pop %v72
    %v74 = vmul.f32 %v61, 1.442695
    %v75 = vpow.pop %v74
    %v76 = vmul.f32 %v62, 1.442695
    %v77 = vpow.pop %v76
    %v78 = vmul.f32 %v63, 1.442695
    %v79 = vpow.pop %v78
    %v80 = vadd.f32 %v65, 1.0
    %v81 = vadd.f32 %v67, 1.0
    %v82 = vadd.f32 %v69, 1.0
    %v83 = vadd.f32 %v71, 1.0
    %v84 = vadd.f32 %v73, 1.0
    %v85 = vadd.f32 %v75, 1.0
    %v86 = vadd.f32 %v77, 1.0
    %v87 = vadd.f32 %v79, 1.0
    %v88 = vrcp.pop %v80
    %v89 = vmul.f32 1.0, %v88
    %v90 = vrcp.pop %v81
    %v91 = vmul.f32 1.0, %v90
    %v92 = vrcp.pop %v82
    %v93 = vmul.f32 1.0, %v92
    %v94 = vrcp.pop %v83
    %v95 = vmul.f32 1.0, %v94
    %v96 = vrcp.pop %v84
    %v97 = vmul.f32 1.0, %v96
    %v98 = vrcp.pop %v85
    %v99 = vmul.f32 1.0, %v98
    %v100 = vrcp.pop %v86
    %v101 = vmul.f32 1.0, %v100
    %v102 = vrcp.pop %v87
    %v103 = vmul.f32 1.0, %v102
    %104 = vst [vmem:[#allocation7] sm:$0xff] %v89
    %105 = vst [vmem:[#allocation7 + $0x8] sm:$0xff] %v91
    %106 = vst [vmem:[#allocation7 + $0x10] sm:$0xff] %v93
    %107 = vst [vmem:[#allocation7 + $0x18] sm:$0xff] %v95
    %108 = vst [vmem:[#allocation7 + $0x20] sm:$0xff] %v97
    %109 = vst [vmem:[#allocation7 + $0x28] sm:$0xff] %v99
    %110 = vst [vmem:[#allocation7 + $0x30] sm:$0xff] %v101
    %111 = vst [vmem:[#allocation7 + $0x38] sm:$0xff] %v103
    // Predicated region
    $region10: #{tpu_custom_call.1} parent=1 // pred_check
      _
    $region11: #{tpu_custom_call.1} parent=1 // pred_check_branch
      %113 = sbr.rel (0) target = $region13
    $region12: #{tpu_custom_call.1} parent=1 // pred_region
      %s115 = ssub.s32 1024, 256
      %116 = vsyncadd [#allocation6], %s115
      %s117 = sshll.u32 [#allocation7], 4
      %s118 = int_to_ptr.vmem [resolvable:$true] %s117
      %123 = dma.vmem_to_hbm [thread:$0]  %s118, 256, %s2, [#allocation6], 256, 256, 16
    $region13: #{tpu_custom_call.1} parent=1 // pred_fallthru
      _
    // Predicated region
    $region14: #{tpu_custom_call.1} parent=1 // pred_check
      _
    $region15: #{tpu_custom_call.1} parent=1 // pred_check_branch
      %125 = sbr.rel (0) target = $region17
    $region16: #{tpu_custom_call.1} parent=1 // pred_region
      %126 = dma.done [#allocation6], 1024
    $region17: #{tpu_custom_call.1} parent=1 // pred_fallthru
      _
    %127 = vsyncpa [#allocation5], 1
    %128 = vsyncpa [#allocation6], 1

</llo_original>
